<compile_context>
chip_gen: v7x
topology: tpu7x:2x2x1
jax: 0.10.0
libtpu: 0.0.40
codegen_flags: <defaults>
</compile_context>

<pallas_src>
import math

import jax
import jax.numpy as jnp
from jax.experimental import pallas as pl
from jax.experimental.pallas import tpu as pltpu

_SUB = 16      # sublane granule for row tiles (valid for f32 and bf16 packing)
_LANE = 128    # lane granule


def _round_up(a, b):
    return -(-a // b) * b


# ----------------------------- scalar glue ---------------------------------

def cheby(i, x):
    # identical semantics to the reference python helper
    if i == 0:
        return 1.0
    elif i == 1:
        return x
    T0, T1 = 1.0, x
    T2 = x
    for _ in range(2, i + 1):
        T2 = 2 * x * T1 - T0
        T0, T1 = T1, T2
    return T2


def init_betas(K):
    # reset_parameters(): betas[j] = cos((K - j + 0.5) * pi / (K + 1)) ** 2
    vals = []
    for j in range(K + 1):
        x_j = math.cos((K - j + 0.5) * math.pi / (K + 1))
        vals.append(x_j ** 2)
    return jnp.array(vals, dtype=jnp.float32)


def compute_coe(betas, K):
    # matches the double loop in forward() (pure scalar math on relu(betas))
    coe_tmp = jax.nn.relu(betas)
    coes = []
    for i in range(K + 1):
        c = coe_tmp[0] * cheby(i, math.cos((K + 0.5) * math.pi / (K + 1)))
        for j in range(1, K + 1):
            x_j = math.cos((K - j + 0.5) * math.pi / (K + 1))
            c = c + coe_tmp[j] * cheby(i, x_j)
        c = 2.0 * c / (K + 1)
        coes.append(c)
    return jnp.stack(coes).astype(jnp.float32)


def fold_coe(coe, K):
    # Reference loop re-propagates the ORIGINAL x every iteration, so with
    # p = lt @ x, a = adj @ x the Tx_2 sequence cycles with period 4:
    #   i % 4 == 2 : 2p - x | i % 4 == 3 : 2p - a | i % 4 == 0 : x | i % 4 == 1 : a
    # Fold everything into  out = c_x * x + c_a * a + c_p * p.
    c_x = coe[0] * 0.5
    c_a = coe[1]
    c_p = jnp.zeros((), coe.dtype)
    for i in range(2, K + 1):
        r = i % 4
        if r == 2:
            c_p = c_p + 2.0 * coe[i]
            c_x = c_x - coe[i]
        elif r == 3:
            c_p = c_p + 2.0 * coe[i]
            c_a = c_a - coe[i]
        elif r == 0:
            c_x = c_x + coe[i]
        else:  # r == 1
            c_a = c_a + coe[i]
    return c_x, c_a, c_p


def sys_adj(adj):
    # TODO(synk): sys_adj is not defined in the reference source; implemented
    # as the symmetric-normalized Laplacian L = I - D^{-1/2} A D^{-1/2}.
    deg = jnp.sum(adj, axis=1)
    d_inv_sqrt = jnp.where(deg > 0, 1.0 / jnp.sqrt(deg), 0.0)
    norm_adj = adj * d_inv_sqrt[:, None] * d_inv_sqrt[None, :]
    return jnp.eye(adj.shape[0], dtype=adj.dtype) - norm_adj


# ----------------------------- Pallas kernel --------------------------------

def chebnetii_kernel(cx_ref, m_ref, xr_ref, xt_ref, out_ref, acc_ref):
    # cx_ref : SMEM (1,) f32             identity-term coefficient c_x
    # m_ref  : VMEM (tile_m, tile_k)     block of the combined matrix c_a*adj + c_p*lt
    # xr_ref : VMEM (tile_k, BF_pad)     k-th row block of the feature slab (MXU dtype)
    # xt_ref : VMEM (tile_m, BF_pad) f32 i-th row block of x (exact identity term)
    # out_ref: VMEM (tile_m, BF_pad)
    # acc_ref: VMEM (tile_m, BF_pad) f32 accumulator, persists across the k axis
    k = pl.program_id(1)

    @pl.when(k == 0)
    def _():
        acc_ref[...] = jnp.zeros_like(acc_ref)

    acc_ref[...] += jnp.dot(m_ref[...], xr_ref[...],
                            preferred_element_type=jnp.float32)

    @pl.when(k == pl.num_programs(1) - 1)
    def _():
        # f32 VPU epilogue: exact identity term, single cast to output dtype.
        out_ref[...] = (acc_ref[...] + cx_ref[0] * xt_ref[...]).astype(out_ref.dtype)


def _choose_tiling(N, BF_pad, mm_itemsize, out_itemsize, budget_bytes):
    """Pick (n_pad, tile_m, tile_k) under an explicit VMEM budget."""

    def usage(tm, tk):
        return (2 * tm * tk * mm_itemsize          # M tile (double-buffered)
                + 2 * tk * BF_pad * mm_itemsize    # RHS tile
                + 2 * tm * BF_pad * 4              # f32 x row tile (epilogue)
                + 2 * tm * BF_pad * out_itemsize   # output tile
                + tm * BF_pad * 4)                 # f32 accumulator scratch

    cap = _round_up(N, _SUB)
    tile_m = _SUB
    for cand in (256, 128, 64, 32, 16):            # powers of two * 16
        if cand > cap or usage(cand, _LANE) > budget_bytes:
            continue
        if _round_up(N, cand) - N <= max(N // 8, _SUB):   # limit row-pad waste
            tile_m = cand
            break
    # >=2 row tiles whenever the graph spans more than one tile (feeds both
    # v7x TensorCores and gives the row-axis pipeline something to overlap).
    while tile_m > _SUB and _round_up(N, tile_m) // tile_m < 2:
        tile_m //= 2

    n_pad = _round_up(N, tile_m)
    if usage(tile_m, n_pad) <= budget_bytes:
        tile_k = n_pad                  # whole contraction axis resident: M and
                                        # the RHS are each read from HBM exactly once
    else:
        tile_k = 512                    # K-tiled: VMEM bounded independently of N
        while tile_k > _LANE and usage(tile_m, tile_k) > budget_bytes:
            tile_k //= 2
        n_pad = _round_up(N, max(tile_m, tile_k))   # both pow2 -> lcm == max
    return n_pad, tile_m, tile_k, usage(tile_m, tile_k)


def chebnetii_forward(x, adj_mat, betas, K, *, mxu_dtype=jnp.bfloat16,
                      vmem_budget_bytes=32 << 20):
    """Returns (out, betas), mirroring the PyTorch module's forward().

    mxu_dtype=jnp.bfloat16 (default) uses the bf16-native MXU path on
    v5e/v6e/v7x with f32 accumulation and an f32 identity-term epilogue;
    pass jnp.float32 for a bit-exact-vs-f32-reference path.
    """
    B, N, F = x.shape
    BF = B * F
    BF_pad = _round_up(BF, _LANE)        # lane-dense output (unmasked vst)

    coe = compute_coe(betas, K)
    c_x, c_a, c_p = fold_coe(coe, K)

    laplacian_tilde = sys_adj(adj_mat) - jnp.eye(N, dtype=adj_mat.dtype)
    # Single combined propagation matrix: one (N, N) HBM stream instead of two.
    M = (c_a * adj_mat.astype(jnp.float32)
         + c_p * laplacian_tilde.astype(jnp.float32))

    # Fold the batch into the lane axis: (B, N, F) -> (N, B*F).
    xr = jnp.transpose(x, (1, 0, 2)).reshape(N, BF).astype(jnp.float32)

    mm_dtype = jnp.dtype(mxu_dtype)
    out_dtype = x.dtype
    out_item = jnp.dtype(out_dtype).itemsize
    n_pad, tile_m, tile_k, vmem_needed = _choose_tiling(
        N, BF_pad, mm_dtype.itemsize, out_item, vmem_budget_bytes)

    # Host-side zero padding: padded M rows/cols and x rows contribute nothing;
    # padded output rows/cols are sliced off below.
    M_p = jnp.pad(M, ((0, n_pad - N), (0, n_pad - N)))
    xr_p = jnp.pad(xr, ((0, n_pad - N), (0, BF_pad - BF)))

    M_mm = M_p.astype(mm_dtype)
    xr_mm = xr_p.astype(mm_dtype)
    cx_arr = jnp.reshape(c_x, (1,)).astype(jnp.float32)

    grid = (n_pad // tile_m, n_pad // tile_k)

    mm_item = mm_dtype.itemsize
    rhs_passes = grid[0] if grid[1] > 1 else 1     # RHS re-read once per row tile
    bytes_accessed = int(n_pad * n_pad * mm_item               # M (read once)
                         + rhs_passes * n_pad * BF_pad * mm_item   # RHS
                         + n_pad * BF_pad * 4                  # f32 x row tiles
                         + n_pad * BF_pad * out_item)          # output write
    cost = pl.CostEstimate(
        flops=int(2 * n_pad * n_pad * BF_pad + 2 * n_pad * BF_pad),
        transcendentals=0,
        bytes_accessed=bytes_accessed)

    # Explicit scoped-VMEM limit: >= needed, capped well under v7x's 64 MiB.
    vmem_limit = int(min(max(2 * vmem_needed, 16 << 20), 48 << 20))

    out_r = pl.pallas_call(
        chebnetii_kernel,
        out_shape=jax.ShapeDtypeStruct((n_pad, BF_pad), out_dtype),
        grid=grid,
        in_specs=[
            pl.BlockSpec(memory_space=pltpu.MemorySpace.SMEM),       # c_x scalar
            pl.BlockSpec((tile_m, tile_k), lambda i, k: (i, k)),     # M block
            pl.BlockSpec((tile_k, BF_pad), lambda i, k: (k, 0)),     # RHS block
            pl.BlockSpec((tile_m, BF_pad), lambda i, k: (i, 0)),     # f32 x rows
        ],
        out_specs=pl.BlockSpec((tile_m, BF_pad), lambda i, k: (i, 0)),
        scratch_shapes=[pltpu.VMEM((tile_m, BF_pad), jnp.float32)],
        compiler_params=pltpu.CompilerParams(
            dimension_semantics=("parallel", "arbitrary"),
            vmem_limit_bytes=vmem_limit),
        cost_estimate=cost,
    )(cx_arr, M_mm, xr_mm, xr_p)

    out = jnp.transpose(out_r[:N, :BF].reshape(N, B, F), (1, 0, 2))
    return out, betas


# ----------------------------- reference (pure JAX) --------------------------

def chebnetii_ref(x, adj_mat, betas, K):
    # Direct transcription of the PyTorch forward (unfolded loop), used to
    # validate the closed-form folding + kernel.
    coe = compute_coe(betas, K)
    N = adj_mat.shape[1]
    laplacian_tilde = sys_adj(adj_mat) - jnp.eye(N, dtype=adj_mat.dtype)
    tx0 = x
    tx1 = jnp.einsum('mn,bnf->bmf', adj_mat, x)
    out = coe[0] / 2.0 * tx0 + coe[1] * tx1
    for i in range(2, K + 1):
        tx2 = jnp.einsum('mn,bnf->bmf', laplacian_tilde, x)
        tx2 = 2.0 * tx2 - tx0
        out = out + coe[i] * tx2
        tx0, tx1 = tx1, tx2
    return out, betas


# ----------------------------- main ------------------------------------------

if __name__ == "__main__":
    K = 5
    B, N, F = 2, 16, 32

    key = jax.random.PRNGKey(0)
    kx, ka = jax.random.split(key)
    x = jax.random.normal(kx, (B, N, F), dtype=jnp.float32)

    a = jax.random.uniform(ka, (N, N), dtype=jnp.float32)
    adj_mat = ((a + a.T) * 0.5 > 0.5).astype(jnp.float32)
    adj_mat = adj_mat * (1.0 - jnp.eye(N, dtype=jnp.float32))   # no self-loops

    betas = init_betas(K)

    out_ref, _ = chebnetii_ref(x, adj_mat, betas, K)

    # Exact f32 MXU path: tight check against the unfolded reference.
    out_f32, _ = chebnetii_forward(x, adj_mat, betas, K, mxu_dtype=jnp.float32)
    out_f32 = jax.block_until_ready(out_f32)
    assert jnp.allclose(out_f32, out_ref, atol=1e-4, rtol=1e-4), "f32 mismatch"

    # Default bf16 MXU path (f32 accumulation + f32 identity epilogue):
    # looser tolerance due to bf16 matmul operands.
    out_bf16, _ = chebnetii_forward(x, adj_mat, betas, K)
    out_bf16 = jax.block_until_ready(out_bf16)
    assert jnp.allclose(out_bf16, out_ref, atol=2.5e-1, rtol=5e-2), "bf16 mismatch"

    print("KERNEL_OK")
</pallas_src>

<mosaic_0001>
module attributes {stable_mosaic.version = 11 : i64} {
  func.func @chebnetii_kernel(%arg0: i32, %arg1: i32, %arg2: memref<1xf32, #tpu.memory_space<smem>>, %arg3: memref<16x16xf32, #tpu.memory_space<vmem>>, %arg4: memref<16x128xf32, #tpu.memory_space<vmem>>, %arg5: memref<16x128xf32, #tpu.memory_space<vmem>>, %arg6: memref<16x128xf32, #tpu.memory_space<vmem>>, %arg7: memref<16x128xf32, #tpu.memory_space<vmem>>) attributes {dimension_semantics = [#tpu.dimension_semantics<parallel>, #tpu.dimension_semantics<arbitrary>], iteration_bounds = array<i64: 1, 1>, scalar_prefetch = 0 : i64, scratch_operands = 1 : i64, tpu.core_type = #tpu.core_type<tc>, window_params = [{transform_indices = @transform_0, window_bounds = array<i64: 1>}, {transform_indices = @transform_1, window_bounds = array<i64: 16, 16>}, {transform_indices = @transform_2, window_bounds = array<i64: 16, 128>}, {transform_indices = @transform_3, window_bounds = array<i64: 16, 128>}, {transform_indices = @transform_4, window_bounds = array<i64: 16, 128>}]} {
    %c0_i32 = arith.constant 0 : i32
    %0 = arith.cmpi eq, %arg1, %c0_i32 : i32
    %1 = arith.extui %0 : i1 to i32
    %c0_i32_0 = arith.constant 0 : i32
    %2 = arith.cmpi ne, %1, %c0_i32_0 : i32
    scf.if %2 {
      %cst_10 = arith.constant 0.000000e+00 : f32
      %12 = vector.broadcast %cst_10 : f32 to vector<16x128xf32>
      %c0_11 = arith.constant 0 : index
      %c0_12 = arith.constant 0 : index
      %13 = vector.load %arg7[%c0_11, %c0_12] : memref<16x128xf32, #tpu.memory_space<vmem>>, vector<16x128xf32>
      tpu.vector_store %arg7[%c0_11, %c0_12], %12 {strides = array<i32>} : memref<16x128xf32, #tpu.memory_space<vmem>>, vector<16x128xf32>,
    } else {
    }
    %c0 = arith.constant 0 : index
    %c0_1 = arith.constant 0 : index
    %3 = vector.load %arg7[%c0, %c0_1] : memref<16x128xf32, #tpu.memory_space<vmem>>, vector<16x128xf32>
    %c0_2 = arith.constant 0 : index
    %c0_3 = arith.constant 0 : index
    %4 = vector.load %arg3[%c0_2, %c0_3] : memref<16x16xf32, #tpu.memory_space<vmem>>, vector<16x16xf32>
    %c0_4 = arith.constant 0 : index
    %c0_5 = arith.constant 0 : index
    %5 = vector.load %arg4[%c0_4, %c0_5] : memref<16x128xf32, #tpu.memory_space<vmem>>, vector<16x128xf32>
    %cst = arith.constant dense<0.000000e+00> : vector<16x128xf32>
    %6 = tpu.matmul %4, %5, %cst {dimension_numbers = #tpu.dot_dimension_numbers<[1], [0], [0], [1], [0, 0, 1, 1], [], []>} : vector<16x16xf32>, vector<16x128xf32>, vector<16x128xf32> -> vector<16x128xf32>
    %7 = arith.addf %3, %6 : vector<16x128xf32>
    %c0_6 = arith.constant 0 : index
    %c0_7 = arith.constant 0 : index
    %8 = vector.load %arg7[%c0_6, %c0_7] : memref<16x128xf32, #tpu.memory_space<vmem>>, vector<16x128xf32>
    tpu.vector_store %arg7[%c0_6, %c0_7], %7 {strides = array<i32>} : memref<16x128xf32, #tpu.memory_space<vmem>>, vector<16x128xf32>,
    %c0_i32_8 = arith.constant 0 : i32
    %9 = arith.cmpi eq, %arg1, %c0_i32_8 : i32
    %10 = arith.extui %9 : i1 to i32
    %c0_i32_9 = arith.constant 0 : i32
    %11 = arith.cmpi ne, %10, %c0_i32_9 : i32
    scf.if %11 {
      %c0_10 = arith.constant 0 : index
      %c0_11 = arith.constant 0 : index
      %12 = vector.load %arg7[%c0_10, %c0_11] : memref<16x128xf32, #tpu.memory_space<vmem>>, vector<16x128xf32>
      %c0_12 = arith.constant 0 : index
      %13 = memref.load %arg2[%c0_12] : memref<1xf32, #tpu.memory_space<smem>>
      %c0_13 = arith.constant 0 : index
      %c0_14 = arith.constant 0 : index
      %14 = vector.load %arg5[%c0_13, %c0_14] : memref<16x128xf32, #tpu.memory_space<vmem>>, vector<16x128xf32>
      %15 = vector.broadcast %13 : f32 to vector<16x128xf32>
      %16 = arith.mulf %15, %14 : vector<16x128xf32>
      %17 = arith.addf %12, %16 : vector<16x128xf32>
      %c0_15 = arith.constant 0 : index
      %c0_16 = arith.constant 0 : index
      %18 = vector.load %arg6[%c0_15, %c0_16] : memref<16x128xf32, #tpu.memory_space<vmem>>, vector<16x128xf32>
      tpu.vector_store %arg6[%c0_15, %c0_16], %17 {strides = array<i32>} : memref<16x128xf32, #tpu.memory_space<vmem>>, vector<16x128xf32>,
    } else {
    }
    return
  }
  func.func @transform_0(%arg0: i32, %arg1: i32) -> i32 {
    %c0_i32 = arith.constant 0 : i32
    %c0_i32_0 = arith.constant 0 : i32
    return %c0_i32 : i32
  }
  func.func @transform_1(%arg0: i32, %arg1: i32) -> (i32, i32) {
    %c0_i32 = arith.constant 0 : i32
    return %arg0, %arg1 : i32, i32
  }
  func.func @transform_2(%arg0: i32, %arg1: i32) -> (i32, i32) {
    %c0_i32 = arith.constant 0 : i32
    %c0_i32_0 = arith.constant 0 : i32
    return %arg1, %c0_i32 : i32, i32
  }
  func.func @transform_3(%arg0: i32, %arg1: i32) -> (i32, i32) {
    %c0_i32 = arith.constant 0 : i32
    %c0_i32_0 = arith.constant 0 : i32
    return %arg0, %c0_i32 : i32, i32
  }
  func.func @transform_4(%arg0: i32, %arg1: i32) -> (i32, i32) {
    %c0_i32 = arith.constant 0 : i32
    %c0_i32_0 = arith.constant 0 : i32
    return %arg0, %c0_i32 : i32, i32
  }
}

</mosaic_0001>

<llo_original>
// kernel: tpu_custom_call.1
$region0: #{tpu_custom_call.1}
  #allocation0 [shape = 'u32[]', space=smem, size = 0x4, offset = 0x4, fixed_abs, tag = 'smem constant byte address 0x4 - core index']
  #allocation1 [shape = 'u32[144,128]{1,0:T(1,128)}', space=vmem, size = 0x12000, scoped, tag = 'internal scratch']
  #allocation2 [shape = 'f32[16,128]{1,0:T(8,128)}', space=vmem, size = 0x2000, scoped, tag = 'scratch operand']
  #allocation3 [shape = 'f32[1]{0:T(128)S(6)}', space=smem, size = 0x200, scoped, tag = 'scoped memory for tpu_custom_call.1']
  %s0 = inlined_call_operand.<no memory space> [shape: f32[1], index: 0, kind: input, shape index: {}]
  %s1 = inlined_call_operand.hbm [shape: f32[16,16], index: 1, kind: input, shape index: {}]
  %s2 = inlined_call_operand.hbm [shape: f32[16,128], index: 2, kind: input, shape index: {}]
  %s3 = inlined_call_operand.hbm [shape: f32[16,128], index: 3, kind: input, shape index: {}]
  %s4 = inlined_call_operand.hbm [shape: f32[16,128], index: 4, kind: output, shape index: {}]
  %s5 = sld [smem:[#allocation0]]
  $region46: #{tpu_custom_call.1} parent=0
    _
  %s7 = ssub.s32 1, %s5
  %s8 = scalar_select 0, %s7, %s5
  %9 = sst [smem:[#allocation3]] %s0
  $region1: #{tpu_custom_call.1} parent=0
    #allocation4 [shape = 'u8[8192]{0}', space=vmem, size = 0x2000, scoped, tag = 'input window, operand 1, single buffered']
    #allocation5 [shape = 's32[1]{0}', space=sflag, size = 0x4, scoped, tag = 'scoped memory for tpu_custom_call.1']
    #allocation6 [shape = 's32[1]{0}', space=sflag, size = 0x4, scoped, tag = 'scoped memory for tpu_custom_call.1']
    #allocation7 [shape = 'u8[8192]{0}', space=vmem, size = 0x2000, scoped, tag = 'input window, operand 2, single buffered']
    #allocation8 [shape = 's32[1]{0}', space=sflag, size = 0x4, scoped, tag = 'scoped memory for tpu_custom_call.1']
    #allocation9 [shape = 'u8[8192]{0}', space=vmem, size = 0x2000, scoped, tag = 'input window, operand 3, single buffered']
    #allocation10 [shape = 'u8[8192]{0}', space=vmem, size = 0x2000, scoped, tag = 'output window, operand 0, single buffered']
    %10 = vsyncpa [#allocation5], 0
    %11 = vsyncpa [#allocation8], 0
    %12 = vsyncpa [#allocation6], 0
    // Predicated region
    $region2: #{tpu_custom_call.1} parent=1 // pred_check
      _
    $region3: #{tpu_custom_call.1} parent=1 // pred_check_branch
      %14 = sbr.rel (0) target = $region5
    $region4: #{tpu_custom_call.1} parent=1 // pred_region
      _
    $region5: #{tpu_custom_call.1} parent=1 // pred_fallthru
      _
    // Predicated region
    $region6: #{tpu_custom_call.1} parent=1 // pred_check
      _
    $region7: #{tpu_custom_call.1} parent=1 // pred_check_branch
      %16 = sbr.rel (0) target = $region9
    $region8: #{tpu_custom_call.1} parent=1 // pred_region
      %s18 = ssub.s32 256, 256
      %19 = vsyncadd [#allocation5], %s18
      %s20 = sshll.u32 [#allocation4], 4
      %s21 = int_to_ptr.vmem [resolvable:$true] %s20
      %26 = dma.hbm_to_vmem [thread:$0]  %s1, 256, %s21, [#allocation5], 128, 128, 8
    $region9: #{tpu_custom_call.1} parent=1 // pred_fallthru
      _
    // Predicated region
    $region10: #{tpu_custom_call.1} parent=1 // pred_check
      _
    $region11: #{tpu_custom_call.1} parent=1 // pred_check_branch
      %28 = sbr.rel (0) target = $region13
    $region12: #{tpu_custom_call.1} parent=1 // pred_region
      %s30 = ssub.s32 256, 256
      %31 = vsyncadd [#allocation8], %s30
      %s32 = sshll.u32 [#allocation7], 4
      %s33 = int_to_ptr.vmem [resolvable:$true] %s32
      %38 = dma.hbm_to_vmem [thread:$0]  %s2, 256, %s33, [#allocation8], 128, 128, 8
    $region13: #{tpu_custom_call.1} parent=1 // pred_fallthru
      _
    // Predicated region
    $region14: #{tpu_custom_call.1} parent=1 // pred_check
      _
    $region15: #{tpu_custom_call.1} parent=1 // pred_check_branch
      %40 = sbr.rel (0) target = $region17
    $region16: #{tpu_custom_call.1} parent=1 // pred_region
      %s42 = ssub.s32 256, 256
      %43 = vsyncadd [#allocation8], %s42
      %s44 = sshll.u32 [#allocation9], 4
      %s45 = int_to_ptr.vmem [resolvable:$true] %s44
      %50 = dma.hbm_to_vmem [thread:$0]  %s3, 256, %s45, [#allocation8], 128, 128, 8
    $region17: #{tpu_custom_call.1} parent=1 // pred_fallthru
      _
    // Predicated region
    $region18: #{tpu_custom_call.1} parent=1 // pred_check
      _
    $region19: #{tpu_custom_call.1} parent=1 // pred_check_branch
      %52 = sbr.rel (0) target = $region21
    $region20: #{tpu_custom_call.1} parent=1 // pred_region
      %53 = dma.done [#allocation5], 256
    $region21: #{tpu_custom_call.1} parent=1 // pred_fallthru
      _
    // Predicated region
    $region22: #{tpu_custom_call.1} parent=1 // pred_check
      _
    $region23: #{tpu_custom_call.1} parent=1 // pred_check_branch
      %55 = sbr.rel (0) target = $region25
    $region24: #{tpu_custom_call.1} parent=1 // pred_region
      %56 = dma.done [#allocation8], 256
    $region25: #{tpu_custom_call.1} parent=1 // pred_fallthru
      _
    // Predicated region
    $region26: #{tpu_custom_call.1} parent=1 // pred_check
      _
    $region27: #{tpu_custom_call.1} parent=1 // pred_check_branch
      %58 = sbr.rel (0) target = $region29
    $region28: #{tpu_custom_call.1} parent=1 // pred_region
      %59 = dma.done [#allocation8], 256
    $region29: #{tpu_custom_call.1} parent=1 // pred_fallthru
      _
    %p60 = scmp.eq.s32.totalorder 0, 0
    // Predicated region
    $region30: #{tpu_custom_call.1} parent=1 // pred_check
      %p61 = pneg %p60
    $region31: #{tpu_custom_call.1} parent=1 // pred_check_branch
      %63 = sbr.rel (%p61) target = $region33
    $region32: #{tpu_custom_call.1} parent=1 // pred_region
      %64 = vst [vmem:[#allocation2] sm:$0xff] 0.0
      %65 = vst [vmem:[#allocation2 + $0x8] sm:$0xff] 0.0
    $region33: #{tpu_custom_call.1} parent=1 // pred_fallthru
      _
    %v66 = vld [vmem:[#allocation2] sm:$0xff]
    %v67 = vld [vmem:[#allocation2 + $0x8] sm:$0xff]
    %v68 = vld [vmem:[#allocation4] sm:$0xff]
    %v69 = vld [vmem:[#allocation4 + $0x8] sm:$0xff]
    %v70 = vld [vmem:[#allocation7] sm:$0xff]
    %v71 = vld [vmem:[#allocation7 + $0x8] sm:$0xff]
    %vm72 = vcmask 130048
    %v74 = vsel %vm72, %v68, 0
    %v77 = vsel %vm72, %v69, 0
    %79 = vmatprep.subr.mxu0 0.0
    %80 = vmatpush1.msra.mxu0 %v70
    %81 = vmatprep.subr.mxu0 0.0
    %82 = vmatpush1.msra.mxu0 %v71
    %83 = vmatprep.subr.mxu0 0.0
    %84 = vmatpush1.msra.mxu0 0.0
    %85 = vmatprep.subr.mxu0 0.0
    %86 = vmatpush1.msra.mxu0 0.0
    %87 = vmatprep.subr.mxu0 0.0
    %88 = vmatpush1.msra.mxu0 0.0
    %89 = vmatprep.subr.mxu0 0.0
    %90 = vmatpush1.msra.mxu0 0.0
    %91 = vmatprep.subr.mxu0 0.0
    %92 = vmatpush1.msra.mxu0 0.0
    %93 = vmatprep.subr.mxu0 0.0
    %94 = vmatpush1.msra.mxu0 0.0
    %95 = vmatprep.subr.mxu0 0.0
    %96 = vmatpush1.msra.mxu0 0.0
    %97 = vmatprep.subr.mxu0 0.0
    %98 = vmatpush1.msra.mxu0 0.0
    %99 = vmatprep.subr.mxu0 0.0
    %100 = vmatpush1.msra.mxu0 0.0
    %101 = vmatprep.subr.mxu0 0.0
    %102 = vmatpush1.msra.mxu0 0.0
    %103 = vmatprep.subr.mxu0 0.0
    %104 = vmatpush1.msra.mxu0 0.0
    %105 = vmatprep.subr.mxu0 0.0
    %106 = vmatpush1.msra.mxu0 0.0
    %107 = vmatprep.subr.mxu0 0.0
    %108 = vmatpush1.msra.mxu0 0.0
    %109 = vmatprep.subr.mxu0 0.0
    %110 = vmatpush1.msra.mxu0 0.0
    %111 = vmatprep.subr.mxu0 0.0
    %112 = vmatpush1.msra.mxu0 0.0
    %113 = vmatprep.subr.mxu0 0.0
    %114 = vmatpush1.msra.mxu0 0.0
    %115 = vmatprep.subr.mxu0 0.0
    %116 = vmatpush1.msra.mxu0 0.0
    %117 = vmatprep.subr.mxu0 0.0
    %118 = vmatpush1.msra.mxu0 0.0
    %119 = vmatprep.subr.mxu0 0.0
    %120 = vmatpush1.msra.mxu0 0.0
    %121 = vmatprep.subr.mxu0 0.0
    %122 = vmatpush1.msra.mxu0 0.0
    %123 = vmatprep.subr.mxu0 0.0
    %124 = vmatpush1.msra.mxu0 0.0
    %125 = vmatprep.subr.mxu0 0.0
    %126 = vmatpush1.msra.mxu0 0.0
    %127 = vmatprep.subr.mxu0 0.0
    %128 = vmatpush1.msra.mxu0 0.0
    %129 = vmatprep.subr.mxu0 0.0
    %130 = vmatpush1.msra.mxu0 0.0
    %131 = vmatprep.subr.mxu0 0.0
    %132 = vmatpush1.msra.mxu0 0.0
    %133 = vmatprep.subr.mxu0 0.0
    %134 = vmatpush1.msra.mxu0 0.0
    %135 = vmatprep.subr.mxu0 0.0
    %136 = vmatpush1.msra.mxu0 0.0
    %137 = vmatprep.subr.mxu0 0.0
    %138 = vmatpush1.msra.mxu0 0.0
    %139 = vmatprep.subr.mxu0 0.0
    %140 = vmatpush1.msra.mxu0 0.0
    %141 = vmatprep.subr.mxu0 0.0
    %142 = vmatpush1.msra.mxu0 0.0
    %143 = vmatprep.mubr.f32.mxu0 0.0
    %144 = vmatmul.mubr.f32.gmra.mrb[0].mxu0 %v74
    %v145 = vpop.f32.mrb[0].mxu0
    %v146 = vadd.f32 0.0, %v145
    %v147 = vpop.f32.mrb[0].mxu0
    %148 = vmatprep.mubr.f32.mxu0 0.0
    %149 = vmatmul.mubr.f32.gmra.mrb[0].mxu0 %v77
    %v150 = vpop.f32.mrb[0].mxu0
    %v151 = vadd.f32 0.0, %v150
    %v152 = vpop.f32.mrb[0].mxu0
    %153 = vdwg.mxu0
    %v154 = vadd.f32 %v66, %v146
    %v155 = vadd.f32 %v67, %v151
    %156 = vst [vmem:[#allocation2] sm:$0xff] %v154
    %157 = vst [vmem:[#allocation2 + $0x8] sm:$0xff] %v155
    // Predicated region
    $region34: #{tpu_custom_call.1} parent=1 // pred_check
      %p158 = pneg %p60
    $region35: #{tpu_custom_call.1} parent=1 // pred_check_branch
      %160 = sbr.rel (%p158) target = $region37
    $region36: #{tpu_custom_call.1} parent=1 // pred_region
      %v161 = vld [vmem:[#allocation2] sm:$0xff]
      %v162 = vld [vmem:[#allocation2 + $0x8] sm:$0xff]
      %s163 = sld [smem:[#allocation3]]
      %v164 = vld [vmem:[#allocation9] sm:$0xff]
      %v165 = vld [vmem:[#allocation9 + $0x8] sm:$0xff]
      %v166 = vstv %s163
      %v167 = vmul.f32 %v166, %v164
      %v168 = vmul.f32 %v166, %v165
      %v169 = vadd.f32 %v161, %v167
      %v170 = vadd.f32 %v162, %v168
      %171 = vst [vmem:[#allocation10] sm:$0xff] %v169
      %172 = vst [vmem:[#allocation10 + $0x8] sm:$0xff] %v170
    $region37: #{tpu_custom_call.1} parent=1 // pred_fallthru
      _
    // Predicated region
    $region38: #{tpu_custom_call.1} parent=1 // pred_check
      _
    $region39: #{tpu_custom_call.1} parent=1 // pred_check_branch
      %174 = sbr.rel (0) target = $region41
    $region40: #{tpu_custom_call.1} parent=1 // pred_region
      %s176 = ssub.s32 256, 256
      %177 = vsyncadd [#allocation6], %s176
      %s178 = sshll.u32 [#allocation10], 4
      %s179 = int_to_ptr.vmem [resolvable:$true] %s178
      %184 = dma.vmem_to_hbm [thread:$0]  %s179, 256, %s4, [#allocation6], 128, 128, 8
    $region41: #{tpu_custom_call.1} parent=1 // pred_fallthru
      _
    // Predicated region
    $region42: #{tpu_custom_call.1} parent=1 // pred_check
      _
    $region43: #{tpu_custom_call.1} parent=1 // pred_check_branch
      %186 = sbr.rel (0) target = $region45
    $region44: #{tpu_custom_call.1} parent=1 // pred_region
      %187 = dma.done [#allocation6], 256
    $region45: #{tpu_custom_call.1} parent=1 // pred_fallthru
      _
    %188 = vsyncpa [#allocation5], 1
    %189 = vsyncpa [#allocation8], 1
    %190 = vsyncpa [#allocation6], 1

</llo_original>
